<compile_context>
chip_gen: v6e
topology: v6e:2x2x1
jax: 0.10.0
libtpu: 0.0.40
codegen_flags: <defaults>
</compile_context>

<pallas_src>
import jax
import jax.numpy as jnp
from jax.experimental import pallas as pl
from jax.experimental.pallas import tpu as pltpu


# --------------------------------------------------------------------------- #
# Kernel
# --------------------------------------------------------------------------- #
def _scale_kernel(scale_ref, x_ref, o_ref):
    # scale_ref: SMEM (1,) f32 holding the precomputed |scale * lr_mult|.
    # x_ref / o_ref: VMEM tiles.  Hot path is a clean vld -> vmul -> vst stream.
    s = scale_ref[0]  # f32 scalar
    dt = x_ref.dtype
    if dt == jnp.float32:
        o_ref[...] = x_ref[...] * s
    elif jnp.issubdtype(dt, jnp.floating):
        # bf16/fp16 fast path: native-dtype multiply (bf16 VALUs on v6e/v7x),
        # skips the f32 unpack/mul/pack sequence.  Tiny precision delta vs the
        # f32-promoted PyTorch result.
        o_ref[...] = x_ref[...] * s.astype(dt)
    else:
        o_ref[...] = (x_ref[...].astype(jnp.float32) * s).astype(o_ref.dtype)


# --------------------------------------------------------------------------- #
# Policy constants
# --------------------------------------------------------------------------- #
_LANE_CHOICES = (4096, 2048, 1024, 512, 256, 128)  # widest lane-dense slab dividing n_elem
_TARGET_TILE_BYTES = 4 * 1024 * 1024  # 4 MiB tiles -> ~16 MiB double-buffered footprint
_VMEM_LIMIT_BYTES = 32 * 1024 * 1024  # explicit limit; safe on v5e/v6e (128 MiB) & v7x (64 MiB)


def _num_tensorcores_per_chip():
    """Best-effort TC count per chip (v7x has 2; v5e/v6e have 1)."""
    try:
        kind = jax.devices()[0].device_kind.lower()
    except Exception:
        return 1
    return 2 if "7" in kind else 1


def _pick_tile_rows(rows, lanes, itemsize, n_tc):
    if rows <= 8:
        return rows  # full-extent block: always legal
    bytes_per_row = lanes * itemsize
    tile_rows = max(8, (_TARGET_TILE_BYTES // bytes_per_row) // 8 * 8)
    tile_rows = min(tile_rows, (rows // 8) * 8)
    if n_tc >= 2:
        # Multi-TC chip (v7x): make sure there are at least n_tc grid steps so
        # the "parallel" grid axis can shard across both TensorCores.  Never
        # shrink below 8 sublanes.  Single-TC chips skip this entirely.
        while tile_rows > 8 and pl.cdiv(rows, tile_rows) < n_tc:
            tile_rows = max(8, (tile_rows // 2) // 8 * 8)
    return tile_rows


# --------------------------------------------------------------------------- #
# pallas_call wrapper on a (rows, lanes) slab
# --------------------------------------------------------------------------- #
def _run_scale_kernel(x2d, scale_eff, tile_rows, donate=False):
    rows, lanes = x2d.shape
    grid = (pl.cdiv(rows, tile_rows),)
    extra = {}
    if donate:
        # Output aliases x's HBM buffer (no second full-size allocation) when
        # the caller donates x at the jit boundary.
        extra["input_output_aliases"] = {1: 0}
    return pl.pallas_call(
        _scale_kernel,
        out_shape=jax.ShapeDtypeStruct((rows, lanes), x2d.dtype),
        grid_spec=pl.GridSpec(
            grid=grid,
            in_specs=[
                pl.BlockSpec(memory_space=pltpu.MemorySpace.SMEM),    # (1,) |scale*lr_mult|
                pl.BlockSpec((tile_rows, lanes), lambda i: (i, 0)),   # x tile
            ],
            out_specs=pl.BlockSpec((tile_rows, lanes), lambda i: (i, 0)),
        ),
        compiler_params=pltpu.CompilerParams(
            # "parallel" is the documented megacore-sharding mechanism; on
            # 1-TC chips it is neutral.
            dimension_semantics=("parallel",),
            vmem_limit_bytes=_VMEM_LIMIT_BYTES,
        ),
        **extra,
    )(scale_eff, x2d)


# --------------------------------------------------------------------------- #
# Public forward
# --------------------------------------------------------------------------- #
def scale_layer_forward(x, scale_param, lr_mult=1.0, *, donate_x=False,
                        _tile_rows_override=None):
    """ScaleLayer forward: returns x * |scale_param * lr_mult|.

    x: any-shape array (e.g. NCHW).  scale_param: (1,) f32 learnable parameter.
    """
    # Tiny (1,)-element op in the wrapper: keeps the Pallas kernel independent
    # of lr_mult (no retrace per lr_mult value).
    scale_eff = jnp.abs(scale_param.astype(jnp.float32) *
                        jnp.float32(lr_mult)).reshape((1,))

    orig_shape = x.shape
    n_elem = x.size
    if n_elem == 0:
        return x

    itemsize = jnp.dtype(x.dtype).itemsize
    n_tc = _num_tensorcores_per_chip()

    # ---- fast path: pure reshape into a lane-dense 2D slab ------------------
    lanes = next((w for w in _LANE_CHOICES if n_elem % w == 0), None)
    if lanes is not None:
        rows = n_elem // lanes
        x2d = x.reshape(rows, lanes)
        tile_rows = _tile_rows_override or _pick_tile_rows(rows, lanes, itemsize, n_tc)
        out2d = _run_scale_kernel(x2d, scale_eff, tile_rows, donate=donate_x)
        return out2d.reshape(orig_shape)

    # ---- ragged tail: kernel on the 128-aligned prefix, jnp on the remainder
    lanes = 128
    flat = x.reshape(-1)
    rem = n_elem % lanes
    n_main = n_elem - rem
    rows = n_main // lanes
    if rows == 0:
        # Fewer than 128 elements total: not worth a kernel launch.
        return (flat * scale_eff[0]).astype(x.dtype).reshape(orig_shape)
    x2d = flat[:n_main].reshape(rows, lanes)
    tile_rows = _tile_rows_override or _pick_tile_rows(rows, lanes, itemsize, n_tc)
    main_out = _run_scale_kernel(x2d, scale_eff, tile_rows).reshape(-1)
    tail_out = (flat[n_main:] * scale_eff[0]).astype(x.dtype)
    return jnp.concatenate([main_out, tail_out]).reshape(orig_shape)


def scale_layer_reference(x, scale_param, lr_mult=1.0):
    """Pure-jnp forward.  Prefer this on hot paths inside a jitted network so
    XLA fuses the multiply with neighbouring ops (no extra HBM round trip)."""
    return x * jnp.abs(scale_param * lr_mult)


def init_scale_param(init_value=1.0, lr_mult=1.0):
    # Matches nn.Parameter(torch.full((1,), init_value / lr_mult, dtype=float32))
    return jnp.full((1,), init_value / lr_mult, dtype=jnp.float32)


# --------------------------------------------------------------------------- #
# Self-test
# --------------------------------------------------------------------------- #
if __name__ == "__main__":
    init_value, lr_mult = 1.5, 2.0
    scale_param = init_scale_param(init_value, lr_mult)

    # 1) Primary small NCHW input (batch=2, channels=4, spatial=16x16).
    x = jax.random.normal(jax.random.PRNGKey(0), (2, 4, 16, 16), dtype=jnp.float32)
    out = jax.block_until_ready(scale_layer_forward(x, scale_param, lr_mult=lr_mult))
    ref = scale_layer_reference(x, scale_param, lr_mult)
    assert out.shape == x.shape and out.dtype == x.dtype
    assert jnp.allclose(out, ref, atol=1e-6), "mismatch vs reference (fast path)"

    # 2) Ragged GRID: rows % tile_rows != 0 (uneven last block, OOB writes masked).
    x_rg = jax.random.normal(jax.random.PRNGKey(1), (2, 3, 40, 128), dtype=jnp.float32)
    out_rg = jax.block_until_ready(
        scale_layer_forward(x_rg, scale_param, lr_mult=lr_mult, _tile_rows_override=8))
    assert jnp.allclose(out_rg, scale_layer_reference(x_rg, scale_param, lr_mult),
                        atol=1e-6), "mismatch vs reference (ragged grid)"

    # 3) Ragged TAIL: n_elem not a multiple of 128 (aligned prefix + jnp tail).
    x_tail = jax.random.normal(jax.random.PRNGKey(2), (3, 5, 7, 11), dtype=jnp.float32)
    out_tail = jax.block_until_ready(scale_layer_forward(x_tail, scale_param, lr_mult=lr_mult))
    assert out_tail.shape == x_tail.shape
    assert jnp.allclose(out_tail, scale_layer_reference(x_tail, scale_param, lr_mult),
                        atol=1e-6), "mismatch vs reference (ragged tail)"

    # 4) bf16 fast path (native-dtype multiply in the kernel).
    x_bf = jax.random.normal(jax.random.PRNGKey(3), (2, 4, 16, 16),
                             dtype=jnp.float32).astype(jnp.bfloat16)
    out_bf = jax.block_until_ready(scale_layer_forward(x_bf, scale_param, lr_mult=lr_mult))
    ref_bf = x_bf.astype(jnp.float32) * jnp.abs(scale_param[0] * lr_mult)
    assert out_bf.dtype == jnp.bfloat16
    assert jnp.allclose(out_bf.astype(jnp.float32), ref_bf, rtol=2e-2, atol=2e-2), \
        "mismatch vs reference (bf16 path)"

    print("KERNEL_OK")
</pallas_src>

<mosaic_0001>
module attributes {stable_mosaic.version = 11 : i64} {
  func.func @_scale_kernel(%arg0: i32, %arg1: memref<1xf32, #tpu.memory_space<smem>>, %arg2: memref<1x2048xf32, #tpu.memory_space<vmem>>, %arg3: memref<1x2048xf32, #tpu.memory_space<vmem>>) attributes {dimension_semantics = [#tpu.dimension_semantics<parallel>], iteration_bounds = array<i64: 1>, scalar_prefetch = 0 : i64, scratch_operands = 0 : i64, tpu.core_type = #tpu.core_type<tc>, window_params = [{transform_indices = @transform_0, window_bounds = array<i64: 1>}, {transform_indices = @transform_1, window_bounds = array<i64: 1, 2048>}, {transform_indices = @transform_2, window_bounds = array<i64: 1, 2048>}]} {
    %c0 = arith.constant 0 : index
    %0 = memref.load %arg1[%c0] : memref<1xf32, #tpu.memory_space<smem>>
    %c0_0 = arith.constant 0 : index
    %c0_1 = arith.constant 0 : index
    %1 = vector.load %arg2[%c0_0, %c0_1] : memref<1x2048xf32, #tpu.memory_space<vmem>>, vector<1x2048xf32>
    %2 = vector.broadcast %0 : f32 to vector<1x2048xf32>
    %3 = arith.mulf %1, %2 : vector<1x2048xf32>
    %c0_2 = arith.constant 0 : index
    %c0_3 = arith.constant 0 : index
    %4 = vector.load %arg3[%c0_2, %c0_3] : memref<1x2048xf32, #tpu.memory_space<vmem>>, vector<1x2048xf32>
    tpu.vector_store %arg3[%c0_2, %c0_3], %3 {strides = array<i32>} : memref<1x2048xf32, #tpu.memory_space<vmem>>, vector<1x2048xf32>,
    return
  }
  func.func @transform_0(%arg0: i32) -> i32 {
    %c0_i32 = arith.constant 0 : i32
    %c0_i32_0 = arith.constant 0 : i32
    return %c0_i32 : i32
  }
  func.func @transform_1(%arg0: i32) -> (i32, i32) {
    %c0_i32 = arith.constant 0 : i32
    %c0_i32_0 = arith.constant 0 : i32
    return %arg0, %c0_i32 : i32, i32
  }
  func.func @transform_2(%arg0: i32) -> (i32, i32) {
    %c0_i32 = arith.constant 0 : i32
    %c0_i32_0 = arith.constant 0 : i32
    return %arg0, %c0_i32 : i32, i32
  }
}

</mosaic_0001>

<llo_original>
// kernel: tpu_custom_call.1
$region0: #{tpu_custom_call.1}
  #allocation0 [shape = 'u32[]', space=smem, size = 0x4, offset = 0x4, fixed_abs, tag = 'smem constant byte address 0x4 - core index']
  #allocation1 [shape = 'u32[144,128]{1,0:T(1,128)}', space=vmem, size = 0x12000, scoped, tag = 'internal scratch']
  #allocation2 [shape = 'f32[1]{0:T(128)S(6)}', space=smem, size = 0x200, scoped, tag = 'scoped memory for tpu_custom_call.1']
  %s0 = inlined_call_operand.<no memory space> [shape: f32[1], index: 0, kind: input, shape index: {}]
  %s1 = inlined_call_operand.hbm [shape: f32[1,2048], index: 1, kind: input, shape index: {}]
  %s2 = inlined_call_operand.hbm [shape: f32[1,2048], index: 2, kind: output, shape index: {}]
  %s3 = sld [smem:[#allocation0]]
  $region22: #{tpu_custom_call.1} parent=0
    _
  %s5 = ssub.s32 1, %s3
  %s6 = scalar_select 0, %s5, %s3
  %7 = sst [smem:[#allocation2]] %s0
  $region1: #{tpu_custom_call.1} parent=0
    #allocation3 [shape = 'u8[8192]{0}', space=vmem, size = 0x2000, scoped, tag = 'input window, operand 1, single buffered']
    #allocation4 [shape = 's32[1]{0}', space=sflag, size = 0x4, scoped, tag = 'scoped memory for tpu_custom_call.1']
    #allocation5 [shape = 's32[1]{0}', space=sflag, size = 0x4, scoped, tag = 'scoped memory for tpu_custom_call.1']
    #allocation6 [shape = 'u8[8192]{0}', space=vmem, size = 0x2000, scoped, tag = 'output window, operand 0, single buffered']
    %8 = vsyncpa [#allocation4], 0
    %9 = vsyncpa [#allocation5], 0
    // Predicated region
    $region2: #{tpu_custom_call.1} parent=1 // pred_check
      _
    $region3: #{tpu_custom_call.1} parent=1 // pred_check_branch
      %11 = sbr.rel (0) target = $region5
    $region4: #{tpu_custom_call.1} parent=1 // pred_region
      _
    $region5: #{tpu_custom_call.1} parent=1 // pred_fallthru
      _
    // Predicated region
    $region6: #{tpu_custom_call.1} parent=1 // pred_check
      _
    $region7: #{tpu_custom_call.1} parent=1 // pred_check_branch
      %13 = sbr.rel (0) target = $region9
    $region8: #{tpu_custom_call.1} parent=1 // pred_region
      %s15 = ssub.s32 256, 256
      %16 = vsyncadd [#allocation4], %s15
      %s18 = sshll.u32 [#allocation3], 4
      %s19 = int_to_ptr.vmem [resolvable:$true] %s18
      %21 = dma.hbm_to_vmem [thread:$0]  %s1, 256, %s19, [#allocation4]
    $region9: #{tpu_custom_call.1} parent=1 // pred_fallthru
      _
    // Predicated region
    $region10: #{tpu_custom_call.1} parent=1 // pred_check
      _
    $region11: #{tpu_custom_call.1} parent=1 // pred_check_branch
      %23 = sbr.rel (0) target = $region13
    $region12: #{tpu_custom_call.1} parent=1 // pred_region
      %24 = dma.done [#allocation4], 256
    $region13: #{tpu_custom_call.1} parent=1 // pred_fallthru
      _
    %s25 = sld [smem:[#allocation2]]
    %v26 = vld [vmem:[#allocation3] sm:$0xff]
    %v27 = vld [vmem:[#allocation3 + $0x8] sm:$0xff]
    %v28 = vstv %s25
    %v29 = vmul.f32 %v26, %v28
    %v30 = vmul.f32 %v27, %v28
    %31 = vst [vmem:[#allocation6] sm:$0xff] %v29
    %32 = vst [vmem:[#allocation6 + $0x8] sm:$0xff] %v30
    // Predicated region
    $region14: #{tpu_custom_call.1} parent=1 // pred_check
      _
    $region15: #{tpu_custom_call.1} parent=1 // pred_check_branch
      %34 = sbr.rel (0) target = $region17
    $region16: #{tpu_custom_call.1} parent=1 // pred_region
      %s36 = ssub.s32 256, 256
      %37 = vsyncadd [#allocation5], %s36
      %s39 = sshll.u32 [#allocation6], 4
      %s40 = int_to_ptr.vmem [resolvable:$true] %s39
      %42 = dma.vmem_to_hbm [thread:$0]  %s40, 256, %s2, [#allocation5]
    $region17: #{tpu_custom_call.1} parent=1 // pred_fallthru
      _
    // Predicated region
    $region18: #{tpu_custom_call.1} parent=1 // pred_check
      _
    $region19: #{tpu_custom_call.1} parent=1 // pred_check_branch
      %44 = sbr.rel (0) target = $region21
    $region20: #{tpu_custom_call.1} parent=1 // pred_region
      %45 = dma.done [#allocation5], 256
    $region21: #{tpu_custom_call.1} parent=1 // pred_fallthru
      _
    %46 = vsyncpa [#allocation4], 1
    %47 = vsyncpa [#allocation5], 1

</llo_original>
